<compile_context>
chip_gen: v7x
topology: tpu7x:2x2x1
jax: 0.10.0
libtpu: 0.0.40
codegen_flags: <defaults>
</compile_context>

<pallas_src>
import functools

import jax
import jax.numpy as jnp
from jax.experimental import pallas as pl
from jax.experimental.pallas import tpu as pltpu

_LANE = 128  # vreg lane width


def _disturb_kernel(y_ref, u_ref, r_ref, out_ref, *, p_keep):
    # keep the true label with prob p_keep = 1 - alpha/100, else take the
    # pre-drawn uniform class. Pure lane-dense VPU select, no reductions.
    keep = u_ref[...] < jnp.float32(p_keep)
    out_ref[...] = jnp.where(keep, y_ref[...], r_ref[...])


def disturb_label(y, *, alpha, C, key, tile_rows=256):
    """JAX wrapper reproducing DisturbLabel.forward for 1-D integer labels."""
    N = y.shape[0]
    if N == 0:
        return y  # matches the empty-batch early-out in the PyTorch module

    a = alpha / 100.0
    p_keep = 1.0 - a  # == p_c - p_i

    # Lane-dense layout: pad N up to a whole (R_pad, 128) slab.
    R = -(-N // _LANE)
    block_rows = min(tile_rows, R)            # tile_rows % 8 == 0 by default
    R_pad = -(-R // block_rows) * block_rows  # block either divides or equals R_pad
    N_pad = R_pad * _LANE

    # Per-label randomness, generated once in the wrapper (see TODO above).
    k_u, k_r = jax.random.split(key)
    u = jax.random.uniform(k_u, (R_pad, _LANE), dtype=jnp.float32)      # U[0,1)
    r = jax.random.randint(k_r, (R_pad, _LANE), 0, C, dtype=jnp.int32)  # uniform class

    y_pad = jnp.zeros((N_pad,), jnp.int32).at[:N].set(y.astype(jnp.int32))
    y2d = y_pad.reshape(R_pad, _LANE)

    kernel = functools.partial(_disturb_kernel, p_keep=p_keep)
    spec = pl.BlockSpec((block_rows, _LANE), lambda i: (i, 0))

    out2d = pl.pallas_call(
        kernel,
        out_shape=jax.ShapeDtypeStruct((R_pad, _LANE), jnp.int32),
        grid=(R_pad // block_rows,),
        in_specs=[spec, spec, spec],
        out_specs=spec,
        compiler_params=pltpu.CompilerParams(
            dimension_semantics=("parallel",)),  # independent samples -> megacore on v7x
    )(y2d, u, r)

    return out2d.reshape(N_pad)[:N]


if __name__ == "__main__":
    alpha = 20.0
    C = 10
    N = 64

    root = jax.random.PRNGKey(0)
    k_labels, k_sample = jax.random.split(root)
    y = jax.random.randint(k_labels, (N,), 0, C, dtype=jnp.int32)

    y_disturbed = disturb_label(y, alpha=alpha, C=C, key=k_sample)
    jax.block_until_ready(y_disturbed)

    assert y_disturbed.shape == (N,)
    assert bool(jnp.all((y_disturbed >= 0) & (y_disturbed < C)))
    # With alpha=20, most labels stay unchanged (P(keep same label) = 0.82).
    assert int(jnp.sum(y_disturbed == y)) > N // 2

    print("KERNEL_OK")
</pallas_src>

<mosaic_0001>
module attributes {stable_mosaic.version = 11 : i64} {
  func.func @_disturb_kernel(%arg0: i32, %arg1: memref<1x128xi32, #tpu.memory_space<vmem>>, %arg2: memref<1x128xf32, #tpu.memory_space<vmem>>, %arg3: memref<1x128xi32, #tpu.memory_space<vmem>>, %arg4: memref<1x128xi32, #tpu.memory_space<vmem>>) attributes {dimension_semantics = [#tpu.dimension_semantics<parallel>], iteration_bounds = array<i64: 1>, scalar_prefetch = 0 : i64, scratch_operands = 0 : i64, tpu.core_type = #tpu.core_type<tc>, window_params = [{transform_indices = @transform_0, window_bounds = array<i64: 1, 128>}, {transform_indices = @transform_1, window_bounds = array<i64: 1, 128>}, {transform_indices = @transform_2, window_bounds = array<i64: 1, 128>}, {transform_indices = @transform_3, window_bounds = array<i64: 1, 128>}]} {
    %c0 = arith.constant 0 : index
    %c0_0 = arith.constant 0 : index
    %0 = vector.load %arg2[%c0, %c0_0] : memref<1x128xf32, #tpu.memory_space<vmem>>, vector<1x128xf32>
    %cst = arith.constant 8.000000e-01 : f32
    %1 = vector.broadcast %cst : f32 to vector<1x128xf32>
    %2 = arith.cmpf olt, %0, %1 : vector<1x128xf32>
    %c0_1 = arith.constant 0 : index
    %c0_2 = arith.constant 0 : index
    %3 = vector.load %arg1[%c0_1, %c0_2] : memref<1x128xi32, #tpu.memory_space<vmem>>, vector<1x128xi32>
    %c0_3 = arith.constant 0 : index
    %c0_4 = arith.constant 0 : index
    %4 = vector.load %arg3[%c0_3, %c0_4] : memref<1x128xi32, #tpu.memory_space<vmem>>, vector<1x128xi32>
    %5 = arith.select %2, %3, %4 : vector<1x128xi1>, vector<1x128xi32>
    %c0_5 = arith.constant 0 : index
    %c0_6 = arith.constant 0 : index
    %6 = vector.load %arg4[%c0_5, %c0_6] : memref<1x128xi32, #tpu.memory_space<vmem>>, vector<1x128xi32>
    tpu.vector_store %arg4[%c0_5, %c0_6], %5 {strides = array<i32>} : memref<1x128xi32, #tpu.memory_space<vmem>>, vector<1x128xi32>,
    return
  }
  func.func @transform_0(%arg0: i32) -> (i32, i32) {
    %c0_i32 = arith.constant 0 : i32
    %c0_i32_0 = arith.constant 0 : i32
    return %arg0, %c0_i32 : i32, i32
  }
  func.func @transform_1(%arg0: i32) -> (i32, i32) {
    %c0_i32 = arith.constant 0 : i32
    %c0_i32_0 = arith.constant 0 : i32
    return %arg0, %c0_i32 : i32, i32
  }
  func.func @transform_2(%arg0: i32) -> (i32, i32) {
    %c0_i32 = arith.constant 0 : i32
    %c0_i32_0 = arith.constant 0 : i32
    return %arg0, %c0_i32 : i32, i32
  }
  func.func @transform_3(%arg0: i32) -> (i32, i32) {
    %c0_i32 = arith.constant 0 : i32
    %c0_i32_0 = arith.constant 0 : i32
    return %arg0, %c0_i32 : i32, i32
  }
}

</mosaic_0001>

<llo_original>
// kernel: tpu_custom_call.1
$region0: #{tpu_custom_call.1}
  #allocation0 [shape = 'u32[]', space=smem, size = 0x4, offset = 0x4, fixed_abs, tag = 'smem constant byte address 0x4 - core index']
  #allocation1 [shape = 'u32[144,128]{1,0:T(1,128)}', space=vmem, size = 0x12000, scoped, tag = 'internal scratch']
  %s0 = inlined_call_operand.hbm [shape: s32[1,128], index: 0, kind: input, shape index: {}]
  %s1 = inlined_call_operand.vmem [shape: f32[1,128], index: 1, kind: input, shape index: {}]
  %s2 = inlined_call_operand.vmem [shape: s32[1,128], index: 2, kind: input, shape index: {}]
  %s3 = inlined_call_operand.hbm [shape: s32[1,128], index: 3, kind: output, shape index: {}]
  %s4 = sld [smem:[#allocation0]]
  $region26: #{tpu_custom_call.1} parent=0
    _
  %s6 = ssub.s32 1, %s4
  %s7 = scalar_select 0, %s6, %s4
  $region1: #{tpu_custom_call.1} parent=0
    #allocation2 [shape = 'u8[512]{0}', space=vmem, size = 0x400, scoped, tag = 'input window, operand 0, single buffered']
    #allocation3 [shape = 's32[1]{0}', space=sflag, size = 0x4, scoped, tag = 'scoped memory for tpu_custom_call.1']
    #allocation4 [shape = 's32[1]{0}', space=sflag, size = 0x4, scoped, tag = 'scoped memory for tpu_custom_call.1']
    #allocation5 [shape = 'u8[512]{0}', space=vmem, size = 0x400, scoped, tag = 'output window, operand 0, single buffered']
    %8 = vsyncpa [#allocation3], 0
    %9 = vsyncpa [#allocation4], 0
    // Predicated region
    $region2: #{tpu_custom_call.1} parent=1 // pred_check
      _
    $region3: #{tpu_custom_call.1} parent=1 // pred_check_branch
      %11 = sbr.rel (0) target = $region5
    $region4: #{tpu_custom_call.1} parent=1 // pred_region
      %s13 = ssub.s32 16, 16
      %14 = vsyncadd [#allocation3], %s13
      %s16 = sshll.u32 [#allocation2], 4
      %s17 = int_to_ptr.vmem [resolvable:$true] %s16
      %19 = dma.hbm_to_vmem [thread:$0]  %s0, 16, %s17, [#allocation3]
    $region5: #{tpu_custom_call.1} parent=1 // pred_fallthru
      _
    // Predicated region
    $region6: #{tpu_custom_call.1} parent=1 // pred_check
      _
    $region7: #{tpu_custom_call.1} parent=1 // pred_check_branch
      %21 = sbr.rel (0) target = $region9
    $region8: #{tpu_custom_call.1} parent=1 // pred_region
      _
    $region9: #{tpu_custom_call.1} parent=1 // pred_fallthru
      _
    // Predicated region
    $region10: #{tpu_custom_call.1} parent=1 // pred_check
      _
    $region11: #{tpu_custom_call.1} parent=1 // pred_check_branch
      %23 = sbr.rel (0) target = $region13
    $region12: #{tpu_custom_call.1} parent=1 // pred_region
      _
    $region13: #{tpu_custom_call.1} parent=1 // pred_fallthru
      _
    // Predicated region
    $region14: #{tpu_custom_call.1} parent=1 // pred_check
      _
    $region15: #{tpu_custom_call.1} parent=1 // pred_check_branch
      %25 = sbr.rel (0) target = $region17
    $region16: #{tpu_custom_call.1} parent=1 // pred_region
      %26 = dma.done [#allocation3], 16
    $region17: #{tpu_custom_call.1} parent=1 // pred_fallthru
      _
    %v27 = vld [vmem:[%s1] sm:$0x1]
    %vm28 = vcmp.lt.f32.partialorder %v27, 0.8
    %v29 = vld [vmem:[#allocation2] sm:$0x1]
    %v30 = vld [vmem:[%s2] sm:$0x1]
    %v31 = vsel %vm28, %v29, %v30
    %32 = vst [vmem:[#allocation5] sm:$0x1] %v31
    // Predicated region
    $region18: #{tpu_custom_call.1} parent=1 // pred_check
      _
    $region19: #{tpu_custom_call.1} parent=1 // pred_check_branch
      %34 = sbr.rel (0) target = $region21
    $region20: #{tpu_custom_call.1} parent=1 // pred_region
      %s36 = ssub.s32 16, 16
      %37 = vsyncadd [#allocation4], %s36
      %s39 = sshll.u32 [#allocation5], 4
      %s40 = int_to_ptr.vmem [resolvable:$true] %s39
      %42 = dma.vmem_to_hbm [thread:$0]  %s40, 16, %s3, [#allocation4]
    $region21: #{tpu_custom_call.1} parent=1 // pred_fallthru
      _
    // Predicated region
    $region22: #{tpu_custom_call.1} parent=1 // pred_check
      _
    $region23: #{tpu_custom_call.1} parent=1 // pred_check_branch
      %44 = sbr.rel (0) target = $region25
    $region24: #{tpu_custom_call.1} parent=1 // pred_region
      %45 = dma.done [#allocation4], 16
    $region25: #{tpu_custom_call.1} parent=1 // pred_fallthru
      _
    %46 = vsyncpa [#allocation3], 1
    %47 = vsyncpa [#allocation4], 1

</llo_original>
